<compile_context>
chip_gen: v6e
topology: v6e:2x2x1
jax: 0.10.0
libtpu: 0.0.40
codegen_flags: <defaults>
</compile_context>

<pallas_src>
import jax
import jax.numpy as jnp
from jax.experimental import pallas as pl
from jax.experimental.pallas import tpu as pltpu

NUM_PREV_DAYS = 30
HIDDEN = 10
OUT = 1


def _round_up(x, m):
    return (x + m - 1) // m * m


def _default_tile_b():
    """Per-generation batch tile: big enough to hide ~0.35us/step overhead,
    small enough for the chip's VMEM given the 30->128 lane-padding (512 B/row
    per buffer, double-buffered)."""
    kind = ""
    try:
        kind = jax.devices()[0].device_kind.lower()
    except Exception:
        pass
    if "v6" in kind:
        return 32768      # 128 MiB VMEM: ~36 MiB double-buffered footprint
    if "v5" in kind:
        return 8192       # stay comfortably inside v5e's small scoped VMEM
    return 16384          # v7x (64 MiB physical) and unknown chips: conservative


def _mlp_kernel(x_ref, w1_ref, b1_ref, w2_ref, b2_ref, o_ref):
    # x_ref : (TILE_B, 30)   w1_ref: (30, 10)   b1_ref: (1, 10)
    # w2_ref: (1, 10)  (torch linear2.weight layout: (out=1, in=10))
    # b2_ref: (1, 1) scalar in SMEM
    # o_ref : (1, TILE_B)   -- lane-dense output row
    x = x_ref[...]                                                    # (TILE_B, 30)
    # Layer 1 on the MXU with f32 accumulation; bias + ReLU on the VPU.
    h = jnp.dot(x, w1_ref[...], preferred_element_type=jnp.float32) + b1_ref[...]
    h = jnp.maximum(h, 0.0)                                           # (TILE_B, 10)
    # Layer 2 (10 -> 1) off the MXU: elementwise mul (VPU) + lane reduce (XLU),
    # then add the scalar bias straight from SMEM.
    y = jnp.sum(h * w2_ref[...], axis=-1, keepdims=True) + b2_ref[0, 0]  # (TILE_B, 1)
    # Relayout to a lane-dense row and store (unmasked vst).
    o_ref[...] = y.reshape(1, y.shape[0]).astype(o_ref.dtype)


def llm_forward(x, w1, b1, w2, b2, *, tile_b=None, stream_bf16=False):
    """relu(x @ w1 + b1) @ w2.T + b2; returns (B, 1).

    x : (B, 30) f32
    w1: (30, 10)  (= torch linear1.weight.T)      b1: (1, 10)
    w2: (1, 10)   (= torch linear2.weight)        b2: (1, 1)
    """
    B = x.shape[0]
    if tile_b is None:
        tile_b = _default_tile_b()
    # Keep TILE_B a multiple of 128 (lane-dense tiles), and never over-pad
    # small batches: a batch that fits one tile runs as a single grid step.
    tile_b = max(128, _round_up(tile_b, 128))
    tile_b = min(tile_b, _round_up(B, 128))
    b_pad = _round_up(B, tile_b)
    if b_pad != B:
        x = jnp.pad(x, ((0, b_pad - B), (0, 0)))
    num_tiles = b_pad // tile_b

    if stream_bf16:
        # Halves the dominant HBM read traffic; MXU still accumulates in f32.
        x = x.astype(jnp.bfloat16)
        w1 = w1.astype(jnp.bfloat16)
    x_bytes = 2 if stream_bf16 else 4

    # VMEM budget: x block pads 30 lanes -> 128 (tile_b*128*itemsize per buffer),
    # output row pads 1 sublane -> 8; both are double-buffered by the pipeline.
    x_buf = tile_b * 128 * x_bytes
    out_buf = tile_b * 8 * 4
    vmem_need = 2 * (x_buf + out_buf) + (4 << 20)          # + weights & slack
    vmem_limit = int(min(max(vmem_need, 32 << 20), 100 << 20))

    flops = 2 * b_pad * NUM_PREV_DAYS * HIDDEN + 4 * b_pad * HIDDEN
    bytes_accessed = (x_bytes * b_pad * NUM_PREV_DAYS + 4 * b_pad
                      + 4 * (w1.size + b1.size + w2.size + b2.size))

    out_row = pl.pallas_call(
        _mlp_kernel,
        out_shape=jax.ShapeDtypeStruct((1, b_pad), jnp.float32),
        grid=(num_tiles,),
        in_specs=[
            pl.BlockSpec((tile_b, NUM_PREV_DAYS), lambda i: (i, 0)),  # streamed x
            pl.BlockSpec((NUM_PREV_DAYS, HIDDEN), lambda i: (0, 0)),  # resident w1
            pl.BlockSpec((1, HIDDEN), lambda i: (0, 0)),              # resident b1
            pl.BlockSpec((1, HIDDEN), lambda i: (0, 0)),              # resident w2
            pl.BlockSpec(memory_space=pltpu.MemorySpace.SMEM),        # scalar b2
        ],
        out_specs=pl.BlockSpec((1, tile_b), lambda i: (0, i)),        # lane-dense row
        compiler_params=pltpu.CompilerParams(
            dimension_semantics=("parallel",),
            vmem_limit_bytes=vmem_limit),
        cost_estimate=pl.CostEstimate(
            flops=flops, transcendentals=0, bytes_accessed=bytes_accessed),
    )(x, w1, b1, w2, b2)

    # Padded tail rows hold relu(b1)@w2+b2 garbage; this slice discards them.
    return out_row[0, :B].reshape(B, OUT)


def init_params(key):
    # Mimic torch.nn.Linear's U(-1/sqrt(fan_in), 1/sqrt(fan_in)) init.
    k1, k2, k3, k4 = jax.random.split(key, 4)
    bound1 = 1.0 / jnp.sqrt(jnp.float32(NUM_PREV_DAYS))
    bound2 = 1.0 / jnp.sqrt(jnp.float32(HIDDEN))
    w1 = jax.random.uniform(k1, (NUM_PREV_DAYS, HIDDEN), jnp.float32,
                            minval=-bound1, maxval=bound1)
    b1 = jax.random.uniform(k2, (1, HIDDEN), jnp.float32,
                            minval=-bound1, maxval=bound1)
    w2 = jax.random.uniform(k3, (OUT, HIDDEN), jnp.float32,
                            minval=-bound2, maxval=bound2)   # torch (out, in) layout
    b2 = jax.random.uniform(k4, (OUT, OUT), jnp.float32,
                            minval=-bound2, maxval=bound2)
    return w1, b1, w2, b2


if __name__ == "__main__":
    key = jax.random.PRNGKey(0)
    pkey, xkey, x2key = jax.random.split(key, 3)
    w1, b1, w2, b2 = init_params(pkey)

    def ref_fn(xx):
        return jnp.maximum(xx @ w1 + b1, 0.0) @ w2.T + b2

    # Small batch: auto tile clamps to one 128-row tile -> single grid step.
    batch = 8
    x = jax.random.normal(xkey, (batch, NUM_PREV_DAYS), jnp.float32)
    out = jax.block_until_ready(llm_forward(x, w1, b1, w2, b2))
    assert out.shape == (batch, OUT)
    assert jnp.allclose(out, ref_fn(x), atol=1e-5, rtol=1e-5)

    # Medium batch with default (auto) tiling: still a single grid step.
    batch2 = 300
    x2 = jax.random.normal(x2key, (batch2, NUM_PREV_DAYS), jnp.float32)
    out2 = jax.block_until_ready(llm_forward(x2, w1, b1, w2, b2))
    assert out2.shape == (batch2, OUT)
    assert jnp.allclose(out2, ref_fn(x2), atol=1e-5, rtol=1e-5)

    # Multi-step grid coverage (explicit small tile FOR TESTING ONLY — real
    # calls should use the default per-chip tiles to stay near HBM roofline):
    # 1000 rows / tile_b=256 -> 4 grid steps, padded tail rows discarded.
    batch3 = 1000
    x3 = jax.random.normal(jax.random.PRNGKey(3), (batch3, NUM_PREV_DAYS),
                           jnp.float32)
    out3 = jax.block_until_ready(llm_forward(x3, w1, b1, w2, b2, tile_b=256))
    assert out3.shape == (batch3, OUT)
    assert jnp.allclose(out3, ref_fn(x3), atol=1e-5, rtol=1e-5)

    print("KERNEL_OK")
</pallas_src>

<mosaic_0001>
module attributes {stable_mosaic.version = 11 : i64} {
  func.func @_mlp_kernel(%arg0: i32, %arg1: memref<128x30xf32, #tpu.memory_space<vmem>>, %arg2: memref<30x10xf32, #tpu.memory_space<vmem>>, %arg3: memref<1x10xf32, #tpu.memory_space<vmem>>, %arg4: memref<1x10xf32, #tpu.memory_space<vmem>>, %arg5: memref<1x1xf32, #tpu.memory_space<smem>>, %arg6: memref<1x128xf32, #tpu.memory_space<vmem>>) attributes {dimension_semantics = [#tpu.dimension_semantics<parallel>], iteration_bounds = array<i64: 1>, scalar_prefetch = 0 : i64, scratch_operands = 0 : i64, tpu.core_type = #tpu.core_type<tc>, window_params = [{transform_indices = @transform_0, window_bounds = array<i64: 128, 30>}, {pipeline_mode = #tpu.pipeline_mode<synchronous>, transform_indices = @transform_1, window_bounds = array<i64: 30, 10>}, {pipeline_mode = #tpu.pipeline_mode<synchronous>, transform_indices = @transform_2, window_bounds = array<i64: 1, 10>}, {pipeline_mode = #tpu.pipeline_mode<synchronous>, transform_indices = @transform_3, window_bounds = array<i64: 1, 10>}, {transform_indices = @transform_4, window_bounds = array<i64: 1, 1>}, {transform_indices = @transform_5, window_bounds = array<i64: 1, 128>}]} {
    %c0 = arith.constant 0 : index
    %c0_0 = arith.constant 0 : index
    %0 = vector.load %arg1[%c0, %c0_0] : memref<128x30xf32, #tpu.memory_space<vmem>>, vector<128x30xf32>
    %c0_1 = arith.constant 0 : index
    %c0_2 = arith.constant 0 : index
    %1 = vector.load %arg2[%c0_1, %c0_2] : memref<30x10xf32, #tpu.memory_space<vmem>>, vector<30x10xf32>
    %cst = arith.constant dense<0.000000e+00> : vector<128x10xf32>
    %2 = tpu.matmul %0, %1, %cst {dimension_numbers = #tpu.dot_dimension_numbers<[1], [0], [0], [1], [0, 0, 1, 1], [], []>} : vector<128x30xf32>, vector<30x10xf32>, vector<128x10xf32> -> vector<128x10xf32>
    %c0_3 = arith.constant 0 : index
    %c0_4 = arith.constant 0 : index
    %3 = vector.load %arg3[%c0_3, %c0_4] : memref<1x10xf32, #tpu.memory_space<vmem>>, vector<1x10xf32>
    %4 = vector.broadcast %3 : vector<1x10xf32> to vector<128x10xf32>
    %5 = arith.addf %2, %4 : vector<128x10xf32>
    %cst_5 = arith.constant 0.000000e+00 : f32
    %6 = vector.broadcast %cst_5 : f32 to vector<128x10xf32>
    %7 = arith.maximumf %5, %6 : vector<128x10xf32>
    %c0_6 = arith.constant 0 : index
    %c0_7 = arith.constant 0 : index
    %8 = vector.load %arg4[%c0_6, %c0_7] : memref<1x10xf32, #tpu.memory_space<vmem>>, vector<1x10xf32>
    %9 = vector.broadcast %8 : vector<1x10xf32> to vector<128x10xf32>
    %10 = arith.mulf %7, %9 : vector<128x10xf32>
    %cst_8 = arith.constant dense<0.000000e+00> : vector<128xf32>
    %11 = vector.multi_reduction <add>, %10, %cst_8 [1] : vector<128x10xf32> to vector<128xf32>
    %12 = vector.shape_cast %11 : vector<128xf32> to vector<128x1xf32>
    %c0_9 = arith.constant 0 : index
    %c0_10 = arith.constant 0 : index
    %13 = memref.load %arg5[%c0_9, %c0_10] : memref<1x1xf32, #tpu.memory_space<smem>>
    %14 = vector.broadcast %13 : f32 to vector<128x1xf32>
    %15 = arith.addf %12, %14 : vector<128x1xf32>
    %16 = vector.shape_cast %15 : vector<128x1xf32> to vector<1x128xf32>
    %c0_11 = arith.constant 0 : index
    %c0_12 = arith.constant 0 : index
    %17 = vector.load %arg6[%c0_11, %c0_12] : memref<1x128xf32, #tpu.memory_space<vmem>>, vector<1x128xf32>
    tpu.vector_store %arg6[%c0_11, %c0_12], %16 {strides = array<i32>} : memref<1x128xf32, #tpu.memory_space<vmem>>, vector<1x128xf32>,
    return
  }
  func.func @transform_0(%arg0: i32) -> (i32, i32) {
    %c0_i32 = arith.constant 0 : i32
    %c0_i32_0 = arith.constant 0 : i32
    return %arg0, %c0_i32 : i32, i32
  }
  func.func @transform_1(%arg0: i32) -> (i32, i32) {
    %c0_i32 = arith.constant 0 : i32
    %c0_i32_0 = arith.constant 0 : i32
    %c0_i32_1 = arith.constant 0 : i32
    return %c0_i32, %c0_i32_0 : i32, i32
  }
  func.func @transform_2(%arg0: i32) -> (i32, i32) {
    %c0_i32 = arith.constant 0 : i32
    %c0_i32_0 = arith.constant 0 : i32
    %c0_i32_1 = arith.constant 0 : i32
    return %c0_i32, %c0_i32_0 : i32, i32
  }
  func.func @transform_3(%arg0: i32) -> (i32, i32) {
    %c0_i32 = arith.constant 0 : i32
    %c0_i32_0 = arith.constant 0 : i32
    %c0_i32_1 = arith.constant 0 : i32
    return %c0_i32, %c0_i32_0 : i32, i32
  }
  func.func @transform_4(%arg0: i32) -> (i32, i32) {
    %c0_i32 = arith.constant 0 : i32
    %c0_i32_0 = arith.constant 0 : i32
    %c0_i32_1 = arith.constant 0 : i32
    return %c0_i32, %c0_i32_0 : i32, i32
  }
  func.func @transform_5(%arg0: i32) -> (i32, i32) {
    %c0_i32 = arith.constant 0 : i32
    %c0_i32_0 = arith.constant 0 : i32
    return %c0_i32, %arg0 : i32, i32
  }
}

</mosaic_0001>

<llo_original>
// kernel: tpu_custom_call.1
$region0: #{tpu_custom_call.1}
  #allocation0 [shape = 'u32[]', space=smem, size = 0x4, offset = 0x4, fixed_abs, tag = 'smem constant byte address 0x4 - core index']
  #allocation1 [shape = 'u32[144,128]{1,0:T(1,128)}', space=vmem, size = 0x12000, scoped, tag = 'internal scratch']
  #allocation2 [shape = 'f32[1,1]{1,0:T(1,128)S(6)}', space=smem, size = 0x200, scoped, tag = 'scoped memory for tpu_custom_call.1']
  %s0 = inlined_call_operand.vmem [shape: f32[128,30], index: 0, kind: input, shape index: {}]
  %s1 = inlined_call_operand.vmem [shape: f32[30,10], index: 1, kind: input, shape index: {}]
  %s2 = inlined_call_operand.vmem [shape: f32[1,10], index: 2, kind: input, shape index: {}]
  %s3 = inlined_call_operand.vmem [shape: f32[1,10], index: 3, kind: input, shape index: {}]
  %s4 = inlined_call_operand.<no memory space> [shape: f32[1,1], index: 4, kind: input, shape index: {}]
  %s5 = inlined_call_operand.hbm [shape: f32[1,128], index: 5, kind: output, shape index: {}]
  %s6 = sld [smem:[#allocation0]]
  $region30: #{tpu_custom_call.1} parent=0
    _
  %s8 = ssub.s32 1, %s6
  %s9 = scalar_select 0, %s8, %s6
  %10 = sst [smem:[#allocation2]] %s4
  $region1: #{tpu_custom_call.1} parent=0
    #allocation3 [shape = 'u8[512]{0}', space=vmem, size = 0x400, scoped, tag = 'output window, operand 0, single buffered']
    #allocation4 [shape = 's32[1]{0}', space=sflag, size = 0x4, scoped, tag = 'scoped memory for tpu_custom_call.1']
    %11 = vsyncpa [#allocation4], 0
    // Predicated region
    $region2: #{tpu_custom_call.1} parent=1 // pred_check
      _
    $region3: #{tpu_custom_call.1} parent=1 // pred_check_branch
      %13 = sbr.rel (0) target = $region5
    $region4: #{tpu_custom_call.1} parent=1 // pred_region
      _
    $region5: #{tpu_custom_call.1} parent=1 // pred_fallthru
      _
    // Predicated region
    $region6: #{tpu_custom_call.1} parent=1 // pred_check
      _
    $region7: #{tpu_custom_call.1} parent=1 // pred_check_branch
      %15 = sbr.rel (0) target = $region9
    $region8: #{tpu_custom_call.1} parent=1 // pred_region
      _
    $region9: #{tpu_custom_call.1} parent=1 // pred_fallthru
      _
    // Predicated region
    $region10: #{tpu_custom_call.1} parent=1 // pred_check
      _
    $region11: #{tpu_custom_call.1} parent=1 // pred_check_branch
      %17 = sbr.rel (0) target = $region13
    $region12: #{tpu_custom_call.1} parent=1 // pred_region
      _
    $region13: #{tpu_custom_call.1} parent=1 // pred_fallthru
      _
    // Predicated region
    $region14: #{tpu_custom_call.1} parent=1 // pred_check
      _
    $region15: #{tpu_custom_call.1} parent=1 // pred_check_branch
      %19 = sbr.rel (0) target = $region17
    $region16: #{tpu_custom_call.1} parent=1 // pred_region
      _
    $region17: #{tpu_custom_call.1} parent=1 // pred_fallthru
      _
    // Predicated region
    $region18: #{tpu_custom_call.1} parent=1 // pred_check
      _
    $region19: #{tpu_custom_call.1} parent=1 // pred_check_branch
      %21 = sbr.rel (0) target = $region21
    $region20: #{tpu_custom_call.1} parent=1 // pred_region
      _
    $region21: #{tpu_custom_call.1} parent=1 // pred_fallthru
      _
    %v22 = vld [vmem:[%s0] sm:$0xff]
    %v23 = vld [vmem:[%s0 + $0x8] sm:$0xff]
    %v24 = vld [vmem:[%s0 + $0x10] sm:$0xff]
    %v25 = vld [vmem:[%s0 + $0x18] sm:$0xff]
    %v26 = vld [vmem:[%s0 + $0x20] sm:$0xff]
    %v27 = vld [vmem:[%s0 + $0x28] sm:$0xff]
    %v28 = vld [vmem:[%s0 + $0x30] sm:$0xff]
    %v29 = vld [vmem:[%s0 + $0x38] sm:$0xff]
    %v30 = vld [vmem:[%s0 + $0x40] sm:$0xff]
    %v31 = vld [vmem:[%s0 + $0x48] sm:$0xff]
    %v32 = vld [vmem:[%s0 + $0x50] sm:$0xff]
    %v33 = vld [vmem:[%s0 + $0x58] sm:$0xff]
    %v34 = vld [vmem:[%s0 + $0x60] sm:$0xff]
    %v35 = vld [vmem:[%s0 + $0x68] sm:$0xff]
    %v36 = vld [vmem:[%s0 + $0x70] sm:$0xff]
    %v37 = vld [vmem:[%s0 + $0x78] sm:$0xff]
    %v38 = vld [vmem:[%s1] sm:$0xff]
    %v39 = vld [vmem:[%s1 + $0x8] sm:$0xff]
    %v40 = vld [vmem:[%s1 + $0x10] sm:$0xff]
    %v41 = vld [vmem:[%s1 + $0x18] sm:$0x3f]
    %v42 = vld [vmem:[%s2] sm:$0x1]
    %v44 = vlaneseq
    %v45 = vshrl.u32 %v44, 7
    %v46 = vsub.s32 0, %v45
    %v47 = vrot.slane %v42, %v46
    %vm49 = vcmask 244736
    %v51 = vsel %vm49, %v22, 0
    %v54 = vsel %vm49, %v23, 0
    %v57 = vsel %vm49, %v24, 0
    %v60 = vsel %vm49, %v25, 0
    %v63 = vsel %vm49, %v26, 0
    %v66 = vsel %vm49, %v27, 0
    %v69 = vsel %vm49, %v28, 0
    %v72 = vsel %vm49, %v29, 0
    %v75 = vsel %vm49, %v30, 0
    %v78 = vsel %vm49, %v31, 0
    %v81 = vsel %vm49, %v32, 0
    %v84 = vsel %vm49, %v33, 0
    %v87 = vsel %vm49, %v34, 0
    %v90 = vsel %vm49, %v35, 0
    %v93 = vsel %vm49, %v36, 0
    %v96 = vsel %vm49, %v37, 0
    %vm98 = vcmask 1045504
    %v100 = vsel %vm98, %v41, 0
    %102 = vmatprep.subr.mxu0 0.0
    %103 = vmatpush1.msra.mxu0 0.0
    %104 = vmatprep.subr.mxu0 0.0
    %105 = vmatpush1.msra.mxu0 0.0
    %106 = vmatprep.subr.mxu0 0.0
    %107 = vmatpush1.msra.mxu0 0.0
    %108 = vmatprep.subr.mxu0 0.0
    %109 = vmatpush1.msra.mxu0 0.0
    %110 = vmatprep.subr.mxu0 0.0
    %111 = vmatpush1.msra.mxu0 0.0
    %112 = vmatprep.subr.mxu0 0.0
    %113 = vmatpush1.msra.mxu0 0.0
    %114 = vmatprep.subr.mxu0 0.0
    %115 = vmatpush1.msra.mxu0 0.0
    %116 = vmatprep.subr.mxu0 0.0
    %117 = vmatpush1.msra.mxu0 0.0
    %118 = vmatprep.subr.mxu0 0.0
    %119 = vmatpush1.msra.mxu0 0.0
    %120 = vmatprep.subr.mxu0 0.0
    %121 = vmatpush1.msra.mxu0 0.0
    %122 = vmatprep.subr.mxu0 0.0
    %123 = vmatpush1.msra.mxu0 0.0
    %124 = vmatprep.subr.mxu0 0.0
    %125 = vmatpush1.msra.mxu0 0.0
    %126 = vmatprep.subr.mxu0 0.0
    %127 = vmatpush1.msra.mxu0 %v100
    %128 = vmatprep.subr.mxu0 0.0
    %129 = vmatpush1.msra.mxu0 %v40
    %130 = vmatprep.subr.mxu0 0.0
    %131 = vmatpush1.msra.mxu0 %v39
    %132 = vmatprep.subr.mxu0 0.0
    %133 = vmatpush1.msra.mxu0 %v38
    %134 = vmatprep.subr.mxu0 0.0
    %135 = vmatpush2.msra.mxu0 0.0
    %136 = vmatprep.subr.mxu0 0.0
    %137 = vmatpush2.msra.mxu0 0.0
    %138 = vmatprep.subr.mxu0 0.0
    %139 = vmatpush2.msra.mxu0 0.0
    %140 = vmatprep.subr.mxu0 0.0
    %141 = vmatpush2.msra.mxu0 0.0
    %142 = vmatprep.subr.mxu0 0.0
    %143 = vmatpush2.msra.mxu0 0.0
    %144 = vmatprep.subr.mxu0 0.0
    %145 = vmatpush2.msra.mxu0 0.0
    %146 = vmatprep.subr.mxu0 0.0
    %147 = vmatpush2.msra.mxu0 0.0
    %148 = vmatprep.subr.mxu0 0.0
    %149 = vmatpush2.msra.mxu0 0.0
    %150 = vmatprep.subr.mxu0 0.0
    %151 = vmatpush2.msra.mxu0 0.0
    %152 = vmatprep.subr.mxu0 0.0
    %153 = vmatpush2.msra.mxu0 0.0
    %154 = vmatprep.subr.mxu0 0.0
    %155 = vmatpush2.msra.mxu0 0.0
    %156 = vmatprep.subr.mxu0 0.0
    %157 = vmatpush2.msra.mxu0 0.0
    %158 = vmatprep.subr.mxu0 0.0
    %159 = vmatpush2.msra.mxu0 0.0
    %160 = vmatprep.subr.mxu0 0.0
    %161 = vmatpush2.msra.mxu0 0.0
    %162 = vmatprep.subr.mxu0 0.0
    %163 = vmatpush2.msra.mxu0 0.0
    %164 = vmatprep.subr.mxu0 0.0
    %165 = vmatpush2.msra.mxu0 0.0
    %166 = vmatprep.mubr.f32.mxu0 0.0
    %167 = vmatmul.mubr.f32.gmra.mxu0 %v51
    %v168 = vpop.f32.mrf.mxu0
    %v169 = vadd.f32 %v47, %v168
    %v170 = vpop.f32.mrf.mxu0
    %171 = vmatprep.mubr.f32.mxu0 0.0
    %172 = vmatmul.mubr.f32.gmra.mxu0 %v54
    %v173 = vpop.f32.mrf.mxu0
    %v174 = vadd.f32 %v47, %v173
    %v175 = vpop.f32.mrf.mxu0
    %176 = vmatprep.mubr.f32.mxu0 0.0
    %177 = vmatmul.mubr.f32.gmra.mxu0 %v57
    %v178 = vpop.f32.mrf.mxu0
    %v179 = vadd.f32 %v47, %v178
    %v180 = vpop.f32.mrf.mxu0
    %181 = vmatprep.mubr.f32.mxu0 0.0
    %182 = vmatmul.mubr.f32.gmra.mxu0 %v60
    %v183 = vpop.f32.mrf.mxu0
    %v184 = vadd.f32 %v47, %v183
    %v185 = vpop.f32.mrf.mxu0
    %186 = vmatprep.mubr.f32.mxu0 0.0
    %187 = vmatmul.mubr.f32.gmra.mxu0 %v63
    %v188 = vpop.f32.mrf.mxu0
    %v189 = vadd.f32 %v47, %v188
    %v190 = vpop.f32.mrf.mxu0
    %191 = vmatprep.mubr.f32.mxu0 0.0
    %192 = vmatmul.mubr.f32.gmra.mxu0 %v66
    %v193 = vpop.f32.mrf.mxu0
    %v194 = vadd.f32 %v47, %v193
    %v195 = vpop.f32.mrf.mxu0
    %196 = vmatprep.mubr.f32.mxu0 0.0
    %197 = vmatmul.mubr.f32.gmra.mxu0 %v69
    %v198 = vpop.f32.mrf.mxu0
    %v199 = vadd.f32 %v47, %v198
    %v200 = vpop.f32.mrf.mxu0
    %201 = vmatprep.mubr.f32.mxu0 0.0
    %202 = vmatmul.mubr.f32.gmra.mxu0 %v72
    %v203 = vpop.f32.mrf.mxu0
    %v204 = vadd.f32 %v47, %v203
    %v205 = vpop.f32.mrf.mxu0
    %206 = vmatprep.mubr.f32.mxu0 0.0
    %207 = vmatmul.mubr.f32.gmra.mxu0 %v75
    %v208 = vpop.f32.mrf.mxu0
    %v209 = vadd.f32 %v47, %v208
    %v210 = vpop.f32.mrf.mxu0
    %211 = vmatprep.mubr.f32.mxu0 0.0
    %212 = vmatmul.mubr.f32.gmra.mxu0 %v78
    %v213 = vpop.f32.mrf.mxu0
    %v214 = vadd.f32 %v47, %v213
    %v215 = vpop.f32.mrf.mxu0
    %216 = vmatprep.mubr.f32.mxu0 0.0
    %217 = vmatmul.mubr.f32.gmra.mxu0 %v81
    %v218 = vpop.f32.mrf.mxu0
    %v219 = vadd.f32 %v47, %v218
    %v220 = vpop.f32.mrf.mxu0
    %221 = vmatprep.mubr.f32.mxu0 0.0
    %222 = vmatmul.mubr.f32.gmra.mxu0 %v84
    %v223 = vpop.f32.mrf.mxu0
    %v224 = vadd.f32 %v47, %v223
    %v225 = vpop.f32.mrf.mxu0
    %226 = vmatprep.mubr.f32.mxu0 0.0
    %227 = vmatmul.mubr.f32.gmra.mxu0 %v87
    %v228 = vpop.f32.mrf.mxu0
    %v229 = vadd.f32 %v47, %v228
    %v230 = vpop.f32.mrf.mxu0
    %231 = vmatprep.mubr.f32.mxu0 0.0
    %232 = vmatmul.mubr.f32.gmra.mxu0 %v90
    %v233 = vpop.f32.mrf.mxu0
    %v234 = vadd.f32 %v47, %v233
    %v235 = vpop.f32.mrf.mxu0
    %236 = vmatprep.mubr.f32.mxu0 0.0
    %237 = vmatmul.mubr.f32.gmra.mxu0 %v93
    %v238 = vpop.f32.mrf.mxu0
    %v239 = vadd.f32 %v47, %v238
    %v240 = vpop.f32.mrf.mxu0
    %241 = vmatprep.mubr.f32.mxu0 0.0
    %242 = vmatmul.mubr.f32.gmra.mxu0 %v96
    %v243 = vpop.f32.mrf.mxu0
    %v244 = vadd.f32 %v47, %v243
    %v245 = vpop.f32.mrf.mxu0
    %246 = vdwg.mxu0
    %v247 = vmax.f32 %v169, 0.0
    %v248 = vmax.f32 %v174, 0.0
    %v249 = vmax.f32 %v179, 0.0
    %v250 = vmax.f32 %v184, 0.0
    %v251 = vmax.f32 %v189, 0.0
    %v252 = vmax.f32 %v194, 0.0
    %v253 = vmax.f32 %v199, 0.0
    %v254 = vmax.f32 %v204, 0.0
    %v255 = vmax.f32 %v209, 0.0
    %v256 = vmax.f32 %v214, 0.0
    %v257 = vmax.f32 %v219, 0.0
    %v258 = vmax.f32 %v224, 0.0
    %v259 = vmax.f32 %v229, 0.0
    %v260 = vmax.f32 %v234, 0.0
    %v261 = vmax.f32 %v239, 0.0
    %v262 = vmax.f32 %v244, 0.0
    %v263 = vld [vmem:[%s3] sm:$0x1]
    %v265 = vlaneseq
    %v266 = vshrl.u32 %v265, 7
    %v267 = vsub.s32 0, %v266
    %v268 = vrot.slane %v263, %v267
    %v270 = vmul.f32 %v247, %v268
    %v271 = vmul.f32 %v248, %v268
    %v272 = vmul.f32 %v249, %v268
    %v273 = vmul.f32 %v250, %v268
    %v274 = vmul.f32 %v251, %v268
    %v275 = vmul.f32 %v252, %v268
    %v276 = vmul.f32 %v253, %v268
    %v277 = vmul.f32 %v254, %v268
    %v278 = vmul.f32 %v255, %v268
    %v279 = vmul.f32 %v256, %v268
    %v280 = vmul.f32 %v257, %v268
    %v281 = vmul.f32 %v258, %v268
    %v282 = vmul.f32 %v259, %v268
    %v283 = vmul.f32 %v260, %v268
    %v284 = vmul.f32 %v261, %v268
    %v285 = vmul.f32 %v262, %v268
    %vm286 = vcmask 80896
    %v287 = vsel %vm286, %v270, 0.0
    %288 = vadd.xlane.f32.xlu0 %v287
    %v289 = vpop.xlane.xlu0 %288
    %v290 = vsel %vm286, %v271, 0.0
    %291 = vadd.xlane.f32.xlu0 %v290
    %v292 = vpop.xlane.xlu0 %291
    %v293 = vsel %vm286, %v272, 0.0
    %294 = vadd.xlane.f32.xlu0 %v293
    %v295 = vpop.xlane.xlu0 %294
    %v296 = vsel %vm286, %v273, 0.0
    %297 = vadd.xlane.f32.xlu0 %v296
    %v298 = vpop.xlane.xlu0 %297
    %v299 = vsel %vm286, %v274, 0.0
    %300 = vadd.xlane.f32.xlu0 %v299
    %v301 = vpop.xlane.xlu0 %300
    %v302 = vsel %vm286, %v275, 0.0
    %303 = vadd.xlane.f32.xlu0 %v302
    %v304 = vpop.xlane.xlu0 %303
    %v305 = vsel %vm286, %v276, 0.0
    %306 = vadd.xlane.f32.xlu0 %v305
    %v307 = vpop.xlane.xlu0 %306
    %v308 = vsel %vm286, %v277, 0.0
    %309 = vadd.xlane.f32.xlu0 %v308
    %v310 = vpop.xlane.xlu0 %309
    %v311 = vsel %vm286, %v278, 0.0
    %312 = vadd.xlane.f32.xlu0 %v311
    %v313 = vpop.xlane.xlu0 %312
    %v314 = vsel %vm286, %v279, 0.0
    %315 = vadd.xlane.f32.xlu0 %v314
    %v316 = vpop.xlane.xlu0 %315
    %v317 = vsel %vm286, %v280, 0.0
    %318 = vadd.xlane.f32.xlu0 %v317
    %v319 = vpop.xlane.xlu0 %318
    %v320 = vsel %vm286, %v281, 0.0
    %321 = vadd.xlane.f32.xlu0 %v320
    %v322 = vpop.xlane.xlu0 %321
    %v323 = vsel %vm286, %v282, 0.0
    %324 = vadd.xlane.f32.xlu0 %v323
    %v325 = vpop.xlane.xlu0 %324
    %v326 = vsel %vm286, %v283, 0.0
    %327 = vadd.xlane.f32.xlu0 %v326
    %v328 = vpop.xlane.xlu0 %327
    %v329 = vsel %vm286, %v284, 0.0
    %330 = vadd.xlane.f32.xlu0 %v329
    %v331 = vpop.xlane.xlu0 %330
    %v332 = vsel %vm286, %v285, 0.0
    %333 = vadd.xlane.f32.xlu0 %v332
    %v334 = vpop.xlane.xlu0 %333
    %s335 = sld [smem:[#allocation2]]
    %v336 = vstv %s335
    %v337 = vadd.f32 %v289, %v336
    %v338 = vadd.f32 %v292, %v336
    %v339 = vadd.f32 %v295, %v336
    %v340 = vadd.f32 %v298, %v336
    %v341 = vadd.f32 %v301, %v336
    %v342 = vadd.f32 %v304, %v336
    %v343 = vadd.f32 %v307, %v336
    %v344 = vadd.f32 %v310, %v336
    %v345 = vadd.f32 %v313, %v336
    %v346 = vadd.f32 %v316, %v336
    %v347 = vadd.f32 %v319, %v336
    %v348 = vadd.f32 %v322, %v336
    %v349 = vadd.f32 %v325, %v336
    %v350 = vadd.f32 %v328, %v336
    %v351 = vadd.f32 %v331, %v336
    %v352 = vadd.f32 %v334, %v336
    %v369 = vlaneseq
    %v370 = vand.u32 %v369, 127
    %v371 = vlaneseq
    %v372 = vshrl.u32 %v371, 7
    %v373 = vsub.s32 %v370, %v372
    %v374 = vrot.slane %v337, %v373
    %v375 = vadd.s32 %v370, 4294967288
    %v376 = vlaneseq
    %v377 = vshrl.u32 %v376, 7
    %v378 = vsub.s32 %v375, %v377
    %v379 = vrot.slane %v338, %v378
    %vm380 = vcmask 130112
    %v381 = vsel %vm380, %v379, %v374
    %v382 = vadd.s32 %v370, 4294967280
    %v383 = vlaneseq
    %v384 = vshrl.u32 %v383, 7
    %v385 = vsub.s32 %v382, %v384
    %v386 = vrot.slane %v339, %v385
    %vm387 = vcmask 195712
    %v388 = vsel %vm387, %v386, %v381
    %v389 = vadd.s32 %v370, 4294967272
    %v390 = vlaneseq
    %v391 = vshrl.u32 %v390, 7
    %v392 = vsub.s32 %v389, %v391
    %v393 = vrot.slane %v340, %v392
    %vm394 = vcmask 261312
    %v395 = vsel %vm394, %v393, %v388
    %v396 = vadd.s32 %v370, 4294967264
    %v397 = vlaneseq
    %v398 = vshrl.u32 %v397, 7
    %v399 = vsub.s32 %v396, %v398
    %v400 = vrot.slane %v341, %v399
    %vm401 = vcmask 326912
    %v402 = vsel %vm401, %v400, %v395
    %v403 = vadd.s32 %v370, 4294967256
    %v404 = vlaneseq
    %v405 = vshrl.u32 %v404, 7
    %v406 = vsub.s32 %v403, %v405
    %v407 = vrot.slane %v342, %v406
    %vm408 = vcmask 392512
    %v409 = vsel %vm408, %v407, %v402
    %v410 = vadd.s32 %v370, 4294967248
    %v411 = vlaneseq
    %v412 = vshrl.u32 %v411, 7
    %v413 = vsub.s32 %v410, %v412
    %v414 = vrot.slane %v343, %v413
    %vm415 = vcmask 458112
    %v416 = vsel %vm415, %v414, %v409
    %v417 = vadd.s32 %v370, 4294967240
    %v418 = vlaneseq
    %v419 = vshrl.u32 %v418, 7
    %v420 = vsub.s32 %v417, %v419
    %v421 = vrot.slane %v344, %v420
    %vm422 = vcmask 523712
    %v423 = vsel %vm422, %v421, %v416
    %v424 = vadd.s32 %v370, 4294967232
    %v425 = vlaneseq
    %v426 = vshrl.u32 %v425, 7
    %v427 = vsub.s32 %v424, %v426
    %v428 = vrot.slane %v345, %v427
    %vm429 = vcmask 589312
    %v430 = vsel %vm429, %v428, %v423
    %v431 = vadd.s32 %v370, 4294967224
    %v432 = vlaneseq
    %v433 = vshrl.u32 %v432, 7
    %v434 = vsub.s32 %v431, %v433
    %v435 = vrot.slane %v346, %v434
    %vm436 = vcmask 654912
    %v437 = vsel %vm436, %v435, %v430
    %v438 = vadd.s32 %v370, 4294967216
    %v439 = vlaneseq
    %v440 = vshrl.u32 %v439, 7
    %v441 = vsub.s32 %v438, %v440
    %v442 = vrot.slane %v347, %v441
    %vm443 = vcmask 720512
    %v444 = vsel %vm443, %v442, %v437
    %v445 = vadd.s32 %v370, 4294967208
    %v446 = vlaneseq
    %v447 = vshrl.u32 %v446, 7
    %v448 = vsub.s32 %v445, %v447
    %v449 = vrot.slane %v348, %v448
    %vm450 = vcmask 786112
    %v451 = vsel %vm450, %v449, %v444
    %v452 = vadd.s32 %v370, 4294967200
    %v453 = vlaneseq
    %v454 = vshrl.u32 %v453, 7
    %v455 = vsub.s32 %v452, %v454
    %v456 = vrot.slane %v349, %v455
    %vm457 = vcmask 851712
    %v458 = vsel %vm457, %v456, %v451
    %v459 = vadd.s32 %v370, 4294967192
    %v460 = vlaneseq
    %v461 = vshrl.u32 %v460, 7
    %v462 = vsub.s32 %v459, %v461
    %v463 = vrot.slane %v350, %v462
    %vm464 = vcmask 917312
    %v465 = vsel %vm464, %v463, %v458
    %v466 = vadd.s32 %v370, 4294967184
    %v467 = vlaneseq
    %v468 = vshrl.u32 %v467, 7
    %v469 = vsub.s32 %v466, %v468
    %v470 = vrot.slane %v351, %v469
    %vm471 = vcmask 982912
    %v472 = vsel %vm471, %v470, %v465
    %v473 = vadd.s32 %v370, 4294967176
    %v474 = vlaneseq
    %v475 = vshrl.u32 %v474, 7
    %v476 = vsub.s32 %v473, %v475
    %v477 = vrot.slane %v352, %v476
    %vm478 = vcmask 1048512
    %v479 = vsel %vm478, %v477, %v472
    %481 = vst [vmem:[#allocation3] sm:$0x1] %v479
    // Predicated region
    $region22: #{tpu_custom_call.1} parent=1 // pred_check
      _
    $region23: #{tpu_custom_call.1} parent=1 // pred_check_branch
      %483 = sbr.rel (0) target = $region25
    $region24: #{tpu_custom_call.1} parent=1 // pred_region
      %s485 = ssub.s32 16, 16
      %486 = vsyncadd [#allocation4], %s485
      %s488 = sshll.u32 [#allocation3], 4
      %s489 = int_to_ptr.vmem [resolvable:$true] %s488
      %491 = dma.vmem_to_hbm [thread:$0]  %s489, 16, %s5, [#allocation4]
    $region25: #{tpu_custom_call.1} parent=1 // pred_fallthru
      _
    // Predicated region
    $region26: #{tpu_custom_call.1} parent=1 // pred_check
      _
    $region27: #{tpu_custom_call.1} parent=1 // pred_check_branch
      %493 = sbr.rel (0) target = $region29
    $region28: #{tpu_custom_call.1} parent=1 // pred_region
      %494 = dma.done [#allocation4], 16
    $region29: #{tpu_custom_call.1} parent=1 // pred_fallthru
      _
    %495 = vsyncpa [#allocation4], 1

</llo_original>
